<compile_context>
chip_gen: v7x
topology: tpu7x:2x2x1
jax: 0.10.0
libtpu: 0.0.40
codegen_flags: <defaults>
</compile_context>

<pallas_src>
import functools

import jax
import jax.numpy as jnp
import numpy as np
from jax.experimental import pallas as pl
from jax.experimental.pallas import tpu as pltpu


# ---------------------------------------------------------------------------
# Edge masks for the flattened-lane depthwise conv.
#   rm_up[n] = 1 if the row above exists, rm_dn[n] = 1 if the row below exists,
#   cm_l[n]  = 1 if the column to the left exists, cm_r[n] = right.
# Only 4 masks are needed: diagonal taps reuse (row mask applied before the
# horizontal shift-by-1) x (column mask applied after), which is equivalent to
# the full per-tap mask (the wrap positions are always killed by the col mask).
# ---------------------------------------------------------------------------
def _make_masks(H, W):
    n = np.arange(H * W)
    r, c = n // W, n % W
    rm_up = (r >= 1)
    rm_dn = (r <= H - 2)
    cm_l = (c >= 1)
    cm_r = (c <= W - 2)
    return jnp.asarray(np.stack([rm_up, rm_dn, cm_l, cm_r]).astype(np.float32))


def _erf_f32(x):
    # Abramowitz & Stegun 7.1.26 (|err| < 1.5e-7): exp/div/select only, all of
    # which lower on the VPU/EUP.  Matches torch's exact (erf) GELU well below
    # the bf16-operand noise floor.
    ax = jnp.abs(x)
    t = 1.0 / (1.0 + 0.3275911 * ax)
    poly = t * (0.254829592 + t * (-0.284496736 + t * (1.421413741 +
               t * (-1.453152027 + t * 1.061405429))))
    e = 1.0 - poly * jnp.exp(-ax * ax)
    return jnp.where(x >= 0, e, -e)


def _gelu_exact(x):
    # F.gelu default (erf-based).
    return 0.5 * x * (1.0 + _erf_f32(x * 0.7071067811865476))


# ---------------------------------------------------------------------------
# Fused kernel.  One grid step handles one batch element and one block of
# `cb` gelu-pairs of hidden channels:
#   z  = w_in_pair_block @ x                (MXU, bf16 in / f32 acc)
#   y  = dwconv3x3(z)                       (VPU + XLU rolls, f32)
#   g  = gelu(y[:cb]) * y[cb:]              (VPU/EUP, f32)
#   out += w_out_block @ g                  (MXU, accumulated in resident VMEM)
# ---------------------------------------------------------------------------
def _gdfn_fused_kernel(x_ref, w_in_ref, w_dw_ref, w_out_ref, m_ref, o_ref,
                       *, W, HW, cb):
    # x_ref:     (1, Cin, HW)   bf16   (constant index -> VMEM-resident)
    # w_in_ref:  (2*cb, Cin)    bf16   (x1 rows then x2 rows of this block)
    # w_dw_ref:  (2*cb, 9)      f32    (same row ordering as w_in_ref)
    # w_out_ref: (1, Cout, cb)  bf16   (columns of project_out for this block)
    # m_ref:     (4, HW)        f32    (rm_up, rm_dn, cm_l, cm_r; resident)
    # o_ref:     (1, Cout, HW)  f32    (resident accumulator across channel axis)
    c = pl.program_id(1)

    x = x_ref[0]                                                    # (Cin, HW) bf16
    z = jnp.dot(w_in_ref[...], x,
                preferred_element_type=jnp.float32)                 # (2cb, HW) f32

    w_dw = w_dw_ref[...]                                            # (2cb, 9) f32
    m = m_ref[...]                                                  # (4, HW)  f32
    rm_up, rm_dn, cm_l, cm_r = m[0:1], m[1:2], m[2:3], m[3:4]

    # --- depthwise 3x3 on the flattened lane axis -------------------------
    # Two arbitrary-offset rolls (rows above/below), row-masked once; the six
    # remaining taps are shift-by-1 rotates of z / north / south.  Column
    # masks are applied once per horizontal direction on the grouped sums.
    north = pltpu.roll(z, shift=W, axis=1) * rm_up                  # z[n - W]
    south = pltpu.roll(z, shift=HW - W, axis=1) * rm_dn             # z[n + W]

    mid = (z * w_dw[:, 4:5]                                         # centre
           + north * w_dw[:, 1:2]                                   # (-1, 0)
           + south * w_dw[:, 7:8])                                  # (+1, 0)
    left = (pltpu.roll(z, shift=1, axis=1) * w_dw[:, 3:4]           # ( 0,-1)
            + pltpu.roll(north, shift=1, axis=1) * w_dw[:, 0:1]     # (-1,-1)
            + pltpu.roll(south, shift=1, axis=1) * w_dw[:, 6:7]     # (+1,-1)
            ) * cm_l
    right = (pltpu.roll(z, shift=HW - 1, axis=1) * w_dw[:, 5:6]     # ( 0,+1)
             + pltpu.roll(north, shift=HW - 1, axis=1) * w_dw[:, 2:3]  # (-1,+1)
             + pltpu.roll(south, shift=HW - 1, axis=1) * w_dw[:, 8:9]  # (+1,+1)
             ) * cm_r
    y = mid + left + right                                          # (2cb, HW) f32

    # --- gelu gating + partial project_out --------------------------------
    g = _gelu_exact(y[:cb, :]) * y[cb:, :]                          # (cb, HW) f32
    partial = jnp.dot(w_out_ref[0], g.astype(jnp.bfloat16),
                      preferred_element_type=jnp.float32)           # (Cout, HW) f32

    @pl.when(c == 0)
    def _init():
        o_ref[0] = partial

    @pl.when(c > 0)
    def _accumulate():
        o_ref[0] = o_ref[0] + partial


# ---------------------------------------------------------------------------
# Wrapper
# ---------------------------------------------------------------------------
def gdfn_forward(x, params, *, channel_block=16):
    B, C, H, W = x.shape
    HW = H * W
    C2 = params["w_in"].shape[0]            # 2 * hidden_channels
    hidden = C2 // 2

    cb = channel_block if hidden % channel_block == 0 else hidden
    n_cblk = hidden // cb

    # bf16 x: halves the resident block / HBM DMA; MXU operand is bf16 anyway.
    x_flat = x.reshape(B, C, HW).astype(jnp.bfloat16)

    w_in = params["w_in"].astype(jnp.bfloat16)                   # (2h, C)
    w_dw = params["w_dw"].reshape(C2, 9).astype(jnp.float32)     # (2h, 9) VPU taps
    w_out = params["w_out"].astype(jnp.bfloat16)                 # (C, h)

    # Reorder rows so block c holds [x1 rows c*cb:(c+1)*cb ; x2 rows c*cb:(c+1)*cb]
    # contiguously (lets one BlockSpec fetch a whole gelu-pair block).
    def pair_blocks(a):
        a1 = a[:hidden].reshape(n_cblk, cb, -1)
        a2 = a[hidden:].reshape(n_cblk, cb, -1)
        return jnp.concatenate([a1, a2], axis=1).reshape(C2, -1)

    w_in_p = pair_blocks(w_in)                                   # (2h, C)
    w_dw_p = pair_blocks(w_dw)                                   # (2h, 9)
    # project_out columns, blocked: (n_cblk, C, cb) so the block is full in the
    # last two dims (avoids a non-128-aligned lane block).
    w_out_b = w_out.reshape(C, n_cblk, cb).transpose(1, 0, 2)    # (n_cblk, C, cb)

    masks = _make_masks(H, W)                                    # (4, HW) f32

    out = pl.pallas_call(
        functools.partial(_gdfn_fused_kernel, W=W, HW=HW, cb=cb),
        out_shape=jax.ShapeDtypeStruct((B, C, HW), jnp.float32),
        grid=(B, n_cblk),
        in_specs=[
            pl.BlockSpec((1, C, HW), lambda b, c: (b, 0, 0)),    # x: resident across c
            pl.BlockSpec((2 * cb, C), lambda b, c: (c, 0)),      # paired project_in rows
            pl.BlockSpec((2 * cb, 9), lambda b, c: (c, 0)),      # paired dwconv taps
            pl.BlockSpec((1, C, cb), lambda b, c: (c, 0, 0)),    # project_out columns
            pl.BlockSpec((4, HW), lambda b, c: (0, 0)),          # masks: VMEM-resident
        ],
        out_specs=pl.BlockSpec((1, C, HW), lambda b, c: (b, 0, 0)),  # accumulator
        compiler_params=pltpu.CompilerParams(
            dimension_semantics=("parallel", "arbitrary")),
    )(x_flat, w_in_p, w_dw_p, w_out_b, masks)

    return out.reshape(B, C, H, W)


# ---------------------------------------------------------------------------
# Pure-JAX fp32 reference (faithful to the PyTorch module)
# ---------------------------------------------------------------------------
def gdfn_reference(x, params):
    B, C, H, W = x.shape
    C2 = params["w_in"].shape[0]
    hidden = C2 // 2

    z = jnp.einsum("oc,bchw->bohw", params["w_in"], x, precision="highest")
    zp = jnp.pad(z, ((0, 0), (0, 0), (1, 1), (1, 1)))
    y = jnp.zeros_like(z)
    for kh in range(3):
        for kw in range(3):
            y = y + zp[:, :, kh:kh + H, kw:kw + W] * \
                params["w_dw"][None, :, kh, kw, None, None]

    x1, x2 = y[:, :hidden], y[:, hidden:]
    g = jax.nn.gelu(x1, approximate=False) * x2          # F.gelu default is erf-based
    return jnp.einsum("oc,bchw->bohw", params["w_out"], g, precision="highest")


if __name__ == "__main__":
    B, C, H, W = 2, 16, 16, 16
    expansion_factor = 2.0
    hidden = int(C * expansion_factor)      # 32
    C2 = 2 * hidden                         # 64

    key = jax.random.PRNGKey(0)
    kx, k1, k2, k3 = jax.random.split(key, 4)

    x = jax.random.normal(kx, (B, C, H, W), dtype=jnp.float32)
    params = {
        # nn.Conv2d(C, 2*hidden, 1, bias=False) weight (2h, C, 1, 1) -> (2h, C)
        "w_in": jax.random.normal(k1, (C2, C), dtype=jnp.float32) / np.sqrt(C),
        # nn.Conv2d(2h, 2h, 3, padding=1, groups=2h, bias=False) weight (2h, 1, 3, 3) -> (2h, 3, 3)
        "w_dw": jax.random.normal(k2, (C2, 3, 3), dtype=jnp.float32) / 3.0,
        # nn.Conv2d(hidden, C, 1, bias=False) weight (C, hidden, 1, 1) -> (C, hidden)
        "w_out": jax.random.normal(k3, (C, hidden), dtype=jnp.float32) / np.sqrt(hidden),
    }

    fwd = jax.jit(gdfn_forward)
    out = jax.block_until_ready(fwd(x, params))
    ref = gdfn_reference(x, params)

    # Tolerance covers bf16 MXU operands / bf16 input cast (fp32 accumulation,
    # no bf16 intermediate anymore); structural errors (wrong tap / mask /
    # roll / pairing) would be O(1) and fail this.
    np.testing.assert_allclose(np.asarray(out), np.asarray(ref), rtol=3e-2, atol=3e-2)

    print("KERNEL_OK")
</pallas_src>

<mosaic_0001>
module attributes {stable_mosaic.version = 11 : i64} {
  func.func @_gdfn_fused_kernel(%arg0: i32, %arg1: i32, %arg2: memref<1x16x256xbf16, #tpu.memory_space<vmem>>, %arg3: memref<32x16xbf16, #tpu.memory_space<vmem>>, %arg4: memref<32x9xf32, #tpu.memory_space<vmem>>, %arg5: memref<1x16x16xbf16, #tpu.memory_space<vmem>>, %arg6: memref<4x256xf32, #tpu.memory_space<vmem>>, %arg7: memref<1x16x256xf32, #tpu.memory_space<vmem>>) attributes {dimension_semantics = [#tpu.dimension_semantics<parallel>, #tpu.dimension_semantics<arbitrary>], iteration_bounds = array<i64: 2, 2>, scalar_prefetch = 0 : i64, scratch_operands = 0 : i64, tpu.core_type = #tpu.core_type<tc>, window_params = [{transform_indices = @transform_0, window_bounds = array<i64: 1, 16, 256>}, {transform_indices = @transform_1, window_bounds = array<i64: 32, 16>}, {transform_indices = @transform_2, window_bounds = array<i64: 32, 9>}, {transform_indices = @transform_3, window_bounds = array<i64: 1, 16, 16>}, {pipeline_mode = #tpu.pipeline_mode<synchronous>, transform_indices = @transform_4, window_bounds = array<i64: 4, 256>}, {transform_indices = @transform_5, window_bounds = array<i64: 1, 16, 256>}]} {
    %c0 = arith.constant 0 : index
    %c0_0 = arith.constant 0 : index
    %c0_1 = arith.constant 0 : index
    %0 = vector.load %arg2[%c0, %c0_0, %c0_1] : memref<1x16x256xbf16, #tpu.memory_space<vmem>>, vector<1x16x256xbf16>
    %1 = vector.shape_cast %0 : vector<1x16x256xbf16> to vector<16x256xbf16>
    %c0_2 = arith.constant 0 : index
    %c0_3 = arith.constant 0 : index
    %2 = vector.load %arg3[%c0_2, %c0_3] : memref<32x16xbf16, #tpu.memory_space<vmem>>, vector<32x16xbf16>
    %cst = arith.constant dense<0.000000e+00> : vector<32x256xf32>
    %3 = tpu.matmul %2, %1, %cst {dimension_numbers = #tpu.dot_dimension_numbers<[1], [0], [0], [1], [0, 0, 1, 1], [], []>} : vector<32x16xbf16>, vector<16x256xbf16>, vector<32x256xf32> -> vector<32x256xf32>
    %c0_4 = arith.constant 0 : index
    %c0_5 = arith.constant 0 : index
    %4 = vector.load %arg4[%c0_4, %c0_5] : memref<32x9xf32, #tpu.memory_space<vmem>>, vector<32x9xf32>
    %c0_6 = arith.constant 0 : index
    %c0_7 = arith.constant 0 : index
    %5 = vector.load %arg6[%c0_6, %c0_7] : memref<4x256xf32, #tpu.memory_space<vmem>>, vector<4x256xf32>
    %6 = vector.extract_strided_slice %5 {offsets = [0, 0], sizes = [1, 256], strides = [1, 1]} : vector<4x256xf32> to vector<1x256xf32>
    %7 = vector.extract_strided_slice %5 {offsets = [1, 0], sizes = [1, 256], strides = [1, 1]} : vector<4x256xf32> to vector<1x256xf32>
    %8 = vector.extract_strided_slice %5 {offsets = [2, 0], sizes = [1, 256], strides = [1, 1]} : vector<4x256xf32> to vector<1x256xf32>
    %9 = vector.extract_strided_slice %5 {offsets = [3, 0], sizes = [1, 256], strides = [1, 1]} : vector<4x256xf32> to vector<1x256xf32>
    %c16_i32 = arith.constant 16 : i32
    %10 = tpu.dynamic_rotate %3 by %c16_i32 dim 1 : vector<32x256xf32>, i32 -> vector<32x256xf32>
    %11 = vector.broadcast %6 : vector<1x256xf32> to vector<32x256xf32>
    %12 = arith.mulf %10, %11 : vector<32x256xf32>
    %c240_i32 = arith.constant 240 : i32
    %13 = tpu.dynamic_rotate %3 by %c240_i32 dim 1 : vector<32x256xf32>, i32 -> vector<32x256xf32>
    %14 = vector.broadcast %7 : vector<1x256xf32> to vector<32x256xf32>
    %15 = arith.mulf %13, %14 : vector<32x256xf32>
    %16 = vector.extract_strided_slice %4 {offsets = [0, 4], sizes = [32, 1], strides = [1, 1]} : vector<32x9xf32> to vector<32x1xf32>
    %17 = vector.broadcast %16 : vector<32x1xf32> to vector<32x256xf32>
    %18 = arith.mulf %3, %17 : vector<32x256xf32>
    %19 = vector.extract_strided_slice %4 {offsets = [0, 1], sizes = [32, 1], strides = [1, 1]} : vector<32x9xf32> to vector<32x1xf32>
    %20 = vector.broadcast %19 : vector<32x1xf32> to vector<32x256xf32>
    %21 = arith.mulf %12, %20 : vector<32x256xf32>
    %22 = arith.addf %18, %21 : vector<32x256xf32>
    %23 = vector.extract_strided_slice %4 {offsets = [0, 7], sizes = [32, 1], strides = [1, 1]} : vector<32x9xf32> to vector<32x1xf32>
    %24 = vector.broadcast %23 : vector<32x1xf32> to vector<32x256xf32>
    %25 = arith.mulf %15, %24 : vector<32x256xf32>
    %26 = arith.addf %22, %25 : vector<32x256xf32>
    %c1_i32 = arith.constant 1 : i32
    %27 = tpu.dynamic_rotate %3 by %c1_i32 dim 1 : vector<32x256xf32>, i32 -> vector<32x256xf32>
    %28 = vector.extract_strided_slice %4 {offsets = [0, 3], sizes = [32, 1], strides = [1, 1]} : vector<32x9xf32> to vector<32x1xf32>
    %29 = vector.broadcast %28 : vector<32x1xf32> to vector<32x256xf32>
    %30 = arith.mulf %27, %29 : vector<32x256xf32>
    %c1_i32_8 = arith.constant 1 : i32
    %31 = tpu.dynamic_rotate %12 by %c1_i32_8 dim 1 : vector<32x256xf32>, i32 -> vector<32x256xf32>
    %32 = vector.extract_strided_slice %4 {offsets = [0, 0], sizes = [32, 1], strides = [1, 1]} : vector<32x9xf32> to vector<32x1xf32>
    %33 = vector.broadcast %32 : vector<32x1xf32> to vector<32x256xf32>
    %34 = arith.mulf %31, %33 : vector<32x256xf32>
    %35 = arith.addf %30, %34 : vector<32x256xf32>
    %c1_i32_9 = arith.constant 1 : i32
    %36 = tpu.dynamic_rotate %15 by %c1_i32_9 dim 1 : vector<32x256xf32>, i32 -> vector<32x256xf32>
    %37 = vector.extract_strided_slice %4 {offsets = [0, 6], sizes = [32, 1], strides = [1, 1]} : vector<32x9xf32> to vector<32x1xf32>
    %38 = vector.broadcast %37 : vector<32x1xf32> to vector<32x256xf32>
    %39 = arith.mulf %36, %38 : vector<32x256xf32>
    %40 = arith.addf %35, %39 : vector<32x256xf32>
    %41 = vector.broadcast %8 : vector<1x256xf32> to vector<32x256xf32>
    %42 = arith.mulf %40, %41 : vector<32x256xf32>
    %c255_i32 = arith.constant 255 : i32
    %43 = tpu.dynamic_rotate %3 by %c255_i32 dim 1 : vector<32x256xf32>, i32 -> vector<32x256xf32>
    %44 = vector.extract_strided_slice %4 {offsets = [0, 5], sizes = [32, 1], strides = [1, 1]} : vector<32x9xf32> to vector<32x1xf32>
    %45 = vector.broadcast %44 : vector<32x1xf32> to vector<32x256xf32>
    %46 = arith.mulf %43, %45 : vector<32x256xf32>
    %c255_i32_10 = arith.constant 255 : i32
    %47 = tpu.dynamic_rotate %12 by %c255_i32_10 dim 1 : vector<32x256xf32>, i32 -> vector<32x256xf32>
    %48 = vector.extract_strided_slice %4 {offsets = [0, 2], sizes = [32, 1], strides = [1, 1]} : vector<32x9xf32> to vector<32x1xf32>
    %49 = vector.broadcast %48 : vector<32x1xf32> to vector<32x256xf32>
    %50 = arith.mulf %47, %49 : vector<32x256xf32>
    %51 = arith.addf %46, %50 : vector<32x256xf32>
    %c255_i32_11 = arith.constant 255 : i32
    %52 = tpu.dynamic_rotate %15 by %c255_i32_11 dim 1 : vector<32x256xf32>, i32 -> vector<32x256xf32>
    %53 = vector.extract_strided_slice %4 {offsets = [0, 8], sizes = [32, 1], strides = [1, 1]} : vector<32x9xf32> to vector<32x1xf32>
    %54 = vector.broadcast %53 : vector<32x1xf32> to vector<32x256xf32>
    %55 = arith.mulf %52, %54 : vector<32x256xf32>
    %56 = arith.addf %51, %55 : vector<32x256xf32>
    %57 = vector.broadcast %9 : vector<1x256xf32> to vector<32x256xf32>
    %58 = arith.mulf %56, %57 : vector<32x256xf32>
    %59 = arith.addf %26, %42 : vector<32x256xf32>
    %60 = arith.addf %59, %58 : vector<32x256xf32>
    %61 = vector.extract_strided_slice %60 {offsets = [0, 0], sizes = [16, 256], strides = [1, 1]} : vector<32x256xf32> to vector<16x256xf32>
    %cst_12 = arith.constant 5.000000e-01 : f32
    %62 = vector.broadcast %cst_12 : f32 to vector<16x256xf32>
    %63 = arith.mulf %62, %61 : vector<16x256xf32>
    %cst_13 = arith.constant 0.707106769 : f32
    %64 = vector.broadcast %cst_13 : f32 to vector<16x256xf32>
    %65 = arith.mulf %61, %64 : vector<16x256xf32>
    %66 = math.absf %65 : vector<16x256xf32>
    %cst_14 = arith.constant 0.327591091 : f32
    %67 = vector.broadcast %cst_14 : f32 to vector<16x256xf32>
    %68 = arith.mulf %67, %66 : vector<16x256xf32>
    %cst_15 = arith.constant 1.000000e+00 : f32
    %69 = vector.broadcast %cst_15 : f32 to vector<16x256xf32>
    %70 = arith.addf %69, %68 : vector<16x256xf32>
    %cst_16 = arith.constant 1.000000e+00 : f32
    %71 = vector.broadcast %cst_16 : f32 to vector<16x256xf32>
    %72 = arith.divf %71, %70 : vector<16x256xf32>
    %cst_17 = arith.constant 1.06140542 : f32
    %73 = vector.broadcast %cst_17 : f32 to vector<16x256xf32>
    %74 = arith.mulf %72, %73 : vector<16x256xf32>
    %cst_18 = arith.constant -1.45315206 : f32
    %75 = vector.broadcast %cst_18 : f32 to vector<16x256xf32>
    %76 = arith.addf %75, %74 : vector<16x256xf32>
    %77 = arith.mulf %72, %76 : vector<16x256xf32>
    %cst_19 = arith.constant 1.42141378 : f32
    %78 = vector.broadcast %cst_19 : f32 to vector<16x256xf32>
    %79 = arith.addf %78, %77 : vector<16x256xf32>
    %80 = arith.mulf %72, %79 : vector<16x256xf32>
    %cst_20 = arith.constant -0.284496725 : f32
    %81 = vector.broadcast %cst_20 : f32 to vector<16x256xf32>
    %82 = arith.addf %81, %80 : vector<16x256xf32>
    %83 = arith.mulf %72, %82 : vector<16x256xf32>
    %cst_21 = arith.constant 0.254829586 : f32
    %84 = vector.broadcast %cst_21 : f32 to vector<16x256xf32>
    %85 = arith.addf %84, %83 : vector<16x256xf32>
    %86 = arith.mulf %72, %85 : vector<16x256xf32>
    %cst_22 = arith.constant 0.000000e+00 : f32
    %87 = vector.broadcast %cst_22 : f32 to vector<16x256xf32>
    %88 = arith.subf %87, %66 : vector<16x256xf32>
    %89 = arith.mulf %88, %66 : vector<16x256xf32>
    %90 = math.exp %89 : vector<16x256xf32>
    %91 = arith.mulf %86, %90 : vector<16x256xf32>
    %cst_23 = arith.constant 1.000000e+00 : f32
    %92 = vector.broadcast %cst_23 : f32 to vector<16x256xf32>
    %93 = arith.subf %92, %91 : vector<16x256xf32>
    %cst_24 = arith.constant 0.000000e+00 : f32
    %94 = vector.broadcast %cst_24 : f32 to vector<16x256xf32>
    %95 = arith.cmpf oge, %65, %94 : vector<16x256xf32>
    %cst_25 = arith.constant 0.000000e+00 : f32
    %96 = vector.broadcast %cst_25 : f32 to vector<16x256xf32>
    %97 = arith.subf %96, %93 : vector<16x256xf32>
    %98 = arith.select %95, %93, %97 : vector<16x256xi1>, vector<16x256xf32>
    %cst_26 = arith.constant 1.000000e+00 : f32
    %99 = vector.broadcast %cst_26 : f32 to vector<16x256xf32>
    %100 = arith.addf %99, %98 : vector<16x256xf32>
    %101 = arith.mulf %63, %100 : vector<16x256xf32>
    %102 = vector.extract_strided_slice %60 {offsets = [16, 0], sizes = [16, 256], strides = [1, 1]} : vector<32x256xf32> to vector<16x256xf32>
    %103 = arith.mulf %101, %102 : vector<16x256xf32>
    %c0_27 = arith.constant 0 : index
    %c0_28 = arith.constant 0 : index
    %c0_29 = arith.constant 0 : index
    %104 = vector.load %arg5[%c0_27, %c0_28, %c0_29] : memref<1x16x16xbf16, #tpu.memory_space<vmem>>, vector<1x16x16xbf16>
    %105 = vector.shape_cast %104 : vector<1x16x16xbf16> to vector<16x16xbf16>
    %106 = arith.truncf %103 : vector<16x256xf32> to vector<16x256xbf16>
    %cst_30 = arith.constant dense<0.000000e+00> : vector<16x256xf32>
    %107 = tpu.matmul %105, %106, %cst_30 {dimension_numbers = #tpu.dot_dimension_numbers<[1], [0], [0], [1], [0, 0, 1, 1], [], []>} : vector<16x16xbf16>, vector<16x256xbf16>, vector<16x256xf32> -> vector<16x256xf32>
    %c0_i32 = arith.constant 0 : i32
    %108 = arith.cmpi eq, %arg1, %c0_i32 : i32
    %109 = arith.extui %108 : i1 to i32
    %c0_i32_31 = arith.constant 0 : i32
    %110 = arith.cmpi ne, %109, %c0_i32_31 : i32
    scf.if %110 {
      %c0_34 = arith.constant 0 : index
      %c0_35 = arith.constant 0 : index
      %c0_36 = arith.constant 0 : index
      %114 = vector.load %arg7[%c0_34, %c0_35, %c0_36] : memref<1x16x256xf32, #tpu.memory_space<vmem>>, vector<1x16x256xf32>
      %115 = vector.shape_cast %114 : vector<1x16x256xf32> to vector<16x256xf32>
      %116 = vector.shape_cast %107 : vector<16x256xf32> to vector<1x16x256xf32>
      tpu.vector_store %arg7[%c0_34, %c0_35, %c0_36], %116 {strides = array<i32>} : memref<1x16x256xf32, #tpu.memory_space<vmem>>, vector<1x16x256xf32>,
    } else {
    }
    %c0_i32_32 = arith.constant 0 : i32
    %111 = arith.cmpi sgt, %arg1, %c0_i32_32 : i32
    %112 = arith.extui %111 : i1 to i32
    %c0_i32_33 = arith.constant 0 : i32
    %113 = arith.cmpi ne, %112, %c0_i32_33 : i32
    scf.if %113 {
      %c0_34 = arith.constant 0 : index
      %c0_35 = arith.constant 0 : index
      %c0_36 = arith.constant 0 : index
      %114 = vector.load %arg7[%c0_34, %c0_35, %c0_36] : memref<1x16x256xf32, #tpu.memory_space<vmem>>, vector<1x16x256xf32>
      %115 = vector.shape_cast %114 : vector<1x16x256xf32> to vector<16x256xf32>
      %116 = arith.addf %115, %107 : vector<16x256xf32>
      %c0_37 = arith.constant 0 : index
      %c0_38 = arith.constant 0 : index
      %c0_39 = arith.constant 0 : index
      %117 = vector.load %arg7[%c0_37, %c0_38, %c0_39] : memref<1x16x256xf32, #tpu.memory_space<vmem>>, vector<1x16x256xf32>
      %118 = vector.shape_cast %117 : vector<1x16x256xf32> to vector<16x256xf32>
      %119 = vector.shape_cast %116 : vector<16x256xf32> to vector<1x16x256xf32>
      tpu.vector_store %arg7[%c0_37, %c0_38, %c0_39], %119 {strides = array<i32>} : memref<1x16x256xf32, #tpu.memory_space<vmem>>, vector<1x16x256xf32>,
    } else {
    }
    return
  }
  func.func @transform_0(%arg0: i32, %arg1: i32) -> (i32, i32, i32) {
    %c0_i32 = arith.constant 0 : i32
    %c0_i32_0 = arith.constant 0 : i32
    %c0_i32_1 = arith.constant 0 : i32
    return %arg0, %c0_i32, %c0_i32_0 : i32, i32, i32
  }
  func.func @transform_1(%arg0: i32, %arg1: i32) -> (i32, i32) {
    %c0_i32 = arith.constant 0 : i32
    %c0_i32_0 = arith.constant 0 : i32
    return %arg1, %c0_i32 : i32, i32
  }
  func.func @transform_2(%arg0: i32, %arg1: i32) -> (i32, i32) {
    %c0_i32 = arith.constant 0 : i32
    %c0_i32_0 = arith.constant 0 : i32
    return %arg1, %c0_i32 : i32, i32
  }
  func.func @transform_3(%arg0: i32, %arg1: i32) -> (i32, i32, i32) {
    %c0_i32 = arith.constant 0 : i32
    %c0_i32_0 = arith.constant 0 : i32
    %c0_i32_1 = arith.constant 0 : i32
    return %arg1, %c0_i32, %c0_i32_0 : i32, i32, i32
  }
  func.func @transform_4(%arg0: i32, %arg1: i32) -> (i32, i32) {
    %c0_i32 = arith.constant 0 : i32
    %c0_i32_0 = arith.constant 0 : i32
    %c0_i32_1 = arith.constant 0 : i32
    return %c0_i32, %c0_i32_0 : i32, i32
  }
  func.func @transform_5(%arg0: i32, %arg1: i32) -> (i32, i32, i32) {
    %c0_i32 = arith.constant 0 : i32
    %c0_i32_0 = arith.constant 0 : i32
    %c0_i32_1 = arith.constant 0 : i32
    return %arg0, %c0_i32, %c0_i32_0 : i32, i32, i32
  }
}

</mosaic_0001>

<llo_original>
// kernel: gdfn_forward.1
$region0: #{gdfn_forward.1}
  #allocation0 [shape = 'u32[]', space=smem, size = 0x4, offset = 0x4, fixed_abs, tag = 'smem constant byte address 0x4 - core index']
  #allocation1 [shape = 'u32[144,128]{1,0:T(1,128)}', space=vmem, size = 0x12000, scoped, tag = 'internal scratch']
  %s0 = inlined_call_operand.vmem [shape: bf16[2,16,256], index: 0, kind: input, shape index: {}]
  %s1 = inlined_call_operand.vmem [shape: bf16[64,16], index: 1, kind: input, shape index: {}]
  %s2 = inlined_call_operand.vmem [shape: f32[64,9], index: 2, kind: input, shape index: {}]
  %s3 = inlined_call_operand.vmem [shape: bf16[2,16,16], index: 3, kind: input, shape index: {}]
  %s4 = inlined_call_operand.vmem [shape: f32[4,256], index: 4, kind: input, shape index: {}]
  %s5 = inlined_call_operand.vmem [shape: f32[2,16,256], index: 5, kind: output, shape index: {}]
  %s6 = sld [smem:[#allocation0]]
  $region61: #{gdfn_forward.1} parent=0
    _
  %s8 = ssub.s32 1, %s6
  %s9 = scalar_select 0, %s8, %s6
  loop: start=0, step=1, limit=6
  $region2: #{gdfn_forward.1} parent=0 // loop_pre_header
    _
  $region3: #{gdfn_forward.1} parent=0 // loop_header
    %s11 = sphi 0, %s15
    %p12 = scmp.ge.s32.totalorder %s11, 6
    %s18 = sphi 0, %s30
    %s19 = sphi 0, %s26
    %s20 = sphi 0, %s18
    %s21 = sphi 0, %s19
    %s22 = sphi 0, %s20
    %s23 = sphi 0, %s21
    %s33 = sphi 0, %s35
    %s36 = sphi 0, %s33
    %s37 = sphi 0, %s36
    %s53 = sphi 0, %s37
    %s59 = sphi 0, %s61
    %s62 = sphi 0, %s59
    %s63 = sphi 0, %s62
    %s79 = sphi 0, %s63
    %s85 = sphi 0, %s87
    %s88 = sphi 0, %s85
    %s89 = sphi 0, %s88
    %s105 = sphi 0, %s89
    %s111 = sphi 0, %s113
    %s114 = sphi 0, %s111
    %s115 = sphi 0, %s114
    %s131 = sphi 0, %s115
    %s135 = sphi 0, %s135
    %s137 = sphi 0, %s135
    %s138 = sphi 0, %s137
    %s152 = sphi 0, %s138
    %s158 = sphi 0, %s160
    %s161 = sphi 0, %s158
    %s162 = sphi 0, %s161
    %s178 = sphi 0, %s162
  $region4: #{gdfn_forward.1} parent=0 // loop_header_branch
    %14 = sbr.rel (%p12) target = $region8
  $region5: #{gdfn_forward.1} parent=0 // loop_body
    %s16 = ssub.s32 %s11, 1
    %s17 = ssub.s32 %s11, 2
    %s24 = sadd.s32 1, %s19
    %p25 = scmp.ge.s32.totalorder %s24, 2
    %s26 = scalar_select %p25, 0, %s24
    %s27 = sadd.s32 1, %s18
    %s28 = scalar_select %p25, %s27, %s18
    %p29 = scmp.ge.s32.totalorder %s28, 2
    %s30 = scalar_select %p29, 0, %s28
    %s31 = ssub.s32 %s18, %s30
    %p32 = scmp.eq.s32.totalorder %s31, 0
    %s34 = sadd.s32 %s33, 1
    %s35 = scalar_select %p32, %s33, %s34
    %p38 = pneg %p32
    %p39 = scmp.eq.s32.totalorder %s11, 3
    %p40 = por %p38, %p39
    %p41 = scmp.ne.s32.totalorder %s33, %s36
    %p42 = scmp.eq.s32.totalorder %s11, 0
    %p43 = por %p41, %p42
    %p44 = scmp.ne.s32.totalorder %s33, %s36
    %p45 = scmp.eq.s32.totalorder %s16, 3
    %p46 = por %p44, %p45
    %p47 = scmp.ne.s32.totalorder %s36, %s37
    %p48 = scmp.eq.s32.totalorder %s16, 0
    %p49 = por %p47, %p48
    %p50 = scmp.ne.s32.totalorder %s36, %s37
    %p51 = scmp.eq.s32.totalorder %s17, 3
    %p52 = por %p50, %p51
    %p54 = scmp.ne.s32.totalorder %s37, %s53
    %p55 = scmp.eq.s32.totalorder %s17, 0
    %p56 = por %p54, %p55
    %s57 = ssub.s32 %s19, %s26
    %p58 = scmp.eq.s32.totalorder %s57, 0
    %s60 = sadd.s32 %s59, 1
    %s61 = scalar_select %p58, %s59, %s60
    %p64 = pneg %p58
    %p65 = scmp.eq.s32.totalorder %s11, 3
    %p66 = por %p64, %p65
    %p67 = scmp.ne.s32.totalorder %s59, %s62
    %p68 = scmp.eq.s32.totalorder %s11, 0
    %p69 = por %p67, %p68
    %p70 = scmp.ne.s32.totalorder %s59, %s62
    %p71 = scmp.eq.s32.totalorder %s16, 3
    %p72 = por %p70, %p71
    %p73 = scmp.ne.s32.totalorder %s62, %s63
    %p74 = scmp.eq.s32.totalorder %s16, 0
    %p75 = por %p73, %p74
    %p76 = scmp.ne.s32.totalorder %s62, %s63
    %p77 = scmp.eq.s32.totalorder %s17, 3
    %p78 = por %p76, %p77
    %p80 = scmp.ne.s32.totalorder %s63, %s79
    %p81 = scmp.eq.s32.totalorder %s17, 0
    %p82 = por %p80, %p81
    %s83 = ssub.s32 %s19, %s26
    %p84 = scmp.eq.s32.totalorder %s83, 0
    %s86 = sadd.s32 %s85, 1
    %s87 = scalar_select %p84, %s85, %s86
    %p90 = pneg %p84
    %p91 = scmp.eq.s32.totalorder %s11, 3
    %p92 = por %p90, %p91
    %p93 = scmp.ne.s32.totalorder %s85, %s88
    %p94 = scmp.eq.s32.totalorder %s11, 0
    %p95 = por %p93, %p94
    %p96 = scmp.ne.s32.totalorder %s85, %s88
    %p97 = scmp.eq.s32.totalorder %s16, 3
    %p98 = por %p96, %p97
    %p99 = scmp.ne.s32.totalorder %s88, %s89
    %p100 = scmp.eq.s32.totalorder %s16, 0
    %p101 = por %p99, %p100
    %p102 = scmp.ne.s32.totalorder %s88, %s89
    %p103 = scmp.eq.s32.totalorder %s17, 3
    %p104 = por %p102, %p103
    %p106 = scmp.ne.s32.totalorder %s89, %s105
    %p107 = scmp.eq.s32.totalorder %s17, 0
    %p108 = por %p106, %p107
    %s109 = ssub.s32 %s19, %s26
    %p110 = scmp.eq.s32.totalorder %s109, 0
    %s112 = sadd.s32 %s111, 1
    %s113 = scalar_select %p110, %s111, %s112
    %p116 = pneg %p110
    %p117 = scmp.eq.s32.totalorder %s11, 3
    %p118 = por %p116, %p117
    %p119 = scmp.ne.s32.totalorder %s111, %s114
    %p120 = scmp.eq.s32.totalorder %s11, 0
    %p121 = por %p119, %p120
    %p122 = scmp.ne.s32.totalorder %s111, %s114
    %p123 = scmp.eq.s32.totalorder %s16, 3
    %p124 = por %p122, %p123
    %p125 = scmp.ne.s32.totalorder %s114, %s115
    %p126 = scmp.eq.s32.totalorder %s16, 0
    %p127 = por %p125, %p126
    %p128 = scmp.ne.s32.totalorder %s114, %s115
    %p129 = scmp.eq.s32.totalorder %s17, 3
    %p130 = por %p128, %p129
    %p132 = scmp.ne.s32.totalorder %s115, %s131
    %p133 = scmp.eq.s32.totalorder %s17, 0
    %p134 = por %p132, %p133
    %s136 = sadd.s32 %s135, 1
    %p139 = scmp.eq.s32.totalorder %s11, 3
    %p140 = scmp.ne.s32.totalorder %s135, %s137
    %p141 = scmp.eq.s32.totalorder %s11, 0
    %p142 = por %p140, %p141
    %p143 = scmp.ne.s32.totalorder %s135, %s137
    %p144 = scmp.eq.s32.totalorder %s16, 3
    %p145 = por %p143, %p144
    %p146 = scmp.ne.s32.totalorder %s137, %s138
    %p147 = scmp.eq.s32.totalorder %s16, 0
    %p148 = por %p146, %p147
    %p149 = scmp.ne.s32.totalorder %s137, %s138
    %p150 = scmp.eq.s32.totalorder %s17, 3
    %p151 = por %p149, %p150
    %p153 = scmp.ne.s32.totalorder %s138, %s152
    %p154 = scmp.eq.s32.totalorder %s17, 0
    %p155 = por %p153, %p154
    %s156 = ssub.s32 %s18, %s30
    %p157 = scmp.eq.s32.totalorder %s156, 0
    %s159 = sadd.s32 %s158, 1
    %s160 = scalar_select %p157, %s158, %s159
    %p163 = pneg %p157
    %p164 = scmp.eq.s32.totalorder %s11, 3
    %p165 = por %p163, %p164
    %p166 = scmp.ne.s32.totalorder %s158, %s161
    %p167 = scmp.eq.s32.totalorder %s11, 0
    %p168 = por %p166, %p167
    %p169 = scmp.ne.s32.totalorder %s158, %s161
    %p170 = scmp.eq.s32.totalorder %s16, 3
    %p171 = por %p169, %p170
    %p172 = scmp.ne.s32.totalorder %s161, %s162
    %p173 = scmp.eq.s32.totalorder %s16, 0
    %p174 = por %p172, %p173
    %p175 = scmp.ne.s32.totalorder %s161, %s162
    %p176 = scmp.eq.s32.totalorder %s17, 3
    %p177 = por %p175, %p176
    %p179 = scmp.ne.s32.totalorder %s162, %s178
    %p180 = scmp.eq.s32.totalorder %s17, 0
    %p181 = por %p179, %p180
    %p182 = scmp.le.s32.totalorder 1, %s11
    %p183 = scmp.lt.s32.totalorder %s11, 5
    %p184 = pnand %p182, %p183
    %p185 = pneg %p184
    // Predicated region
    $region9: #{gdfn_forward.1} parent=5 // pred_check
      _
    $region10: #{gdfn_forward.1} parent=5 // pred_check_branch
      %187 = sbr.rel (%p184) target = $region12
    $region11: #{gdfn_forward.1} parent=5 // pred_region
      %s188 = ssub.s32 %s11, 1
      // Predicated region
      $region13: #{gdfn_forward.1} parent=11 // pred_check
        %p189 = pneg %p148
      $region14: #{gdfn_forward.1} parent=11 // pred_check_branch
        %191 = sbr.rel (%p189) target = $region16
      $region15: #{gdfn_forward.1} parent=11 // pred_region
        _
      $region16: #{gdfn_forward.1} parent=11 // pred_fallthru
        _
    $region12: #{gdfn_forward.1} parent=5 // pred_fallthru
      _
    %p192 = scmp.lt.s32.totalorder %s11, 4
    // Predicated region
    $region17: #{gdfn_forward.1} parent=5 // pred_check
      %p193 = pneg %p192
    $region18: #{gdfn_forward.1} parent=5 // pred_check_branch
      %195 = sbr.rel (%p193) target = $region20
    $region19: #{gdfn_forward.1} parent=5 // pred_region
      // Predicated region
      $region21: #{gdfn_forward.1} parent=19 // pred_check
        %p196 = pneg %p43
      $region22: #{gdfn_forward.1} parent=19 // pred_check_branch
        %198 = sbr.rel (%p196) target = $region24
      $region23: #{gdfn_forward.1} parent=19 // pred_region
        %p199 = scmp.lt.s32.totalorder %s18, 1
        %s200 = scalar_select %p199, %s18, 1
        %s201 = smul.addr %s200, 4
        %s202 = smul.addr %s201, 4
        %s203 = scalar_lea.vmem %s0, %s202
      $region24: #{gdfn_forward.1} parent=19 // pred_fallthru
        _
      // Predicated region
      $region25: #{gdfn_forward.1} parent=19 // pred_check
        %p204 = pneg %p69
      $region26: #{gdfn_forward.1} parent=19 // pred_check_branch
        %206 = sbr.rel (%p204) target = $region28
      $region27: #{gdfn_forward.1} parent=19 // pred_region
        %s207 = smul.u32 4, %s19
        %p208 = scmp.lt.s32.totalorder %s207, 7
        %s209 = scalar_select %p208, %s207, 7
        %s210 = smul.addr %s209, 4
        %s211 = scalar_lea.vmem %s1, %s210
        %s212 = smul.u32 4, %s19
      $region28: #{gdfn_forward.1} parent=19 // pred_fallthru
        _
      // Predicated region
      $region29: #{gdfn_forward.1} parent=19 // pred_check
        %p213 = pneg %p95
      $region30: #{gdfn_forward.1} parent=19 // pred_check_branch
        %215 = sbr.rel (%p213) target = $region32
      $region31: #{gdfn_forward.1} parent=19 // pred_region
        %s216 = smul.u32 4, %s19
        %p217 = scmp.lt.s32.totalorder %s216, 7
        %s218 = scalar_select %p217, %s216, 7
        %s219 = smul.addr %s218, 8
        %s220 = scalar_lea.vmem %s2, %s219
        %s221 = smul.u32 4, %s19
      $region32: #{gdfn_forward.1} parent=19 // pred_fallthru
        _
      // Predicated region
      $region33: #{gdfn_forward.1} parent=19 // pred_check
        %p222 = pneg %p121
      $region34: #{gdfn_forward.1} parent=19 // pred_check_branch
        %224 = sbr.rel (%p222) target = $region36
      $region35: #{gdfn_forward.1} parent=19 // pred_region
        %p225 = scmp.lt.s32.totalorder %s19, 1
        %s226 = scalar_select %p225, %s19, 1
        %s227 = smul.addr %s226, 2
        %s228 = smul.addr %s227, 4
        %s229 = scalar_lea.vmem %s3, %s228
      $region36: #{gdfn_forward.1} parent=19 // pred_fallthru
        _
    $region20: #{gdfn_forward.1} parent=5 // pred_fallthru
      _
    %p230 = scmp.le.s32.totalorder 1, %s11
    %p231 = scmp.lt.s32.totalorder %s11, 5
    %p232 = pnand %p230, %p231
    %p233 = pneg %p232
    // Predicated region
    $region37: #{gdfn_forward.1} parent=5 // pred_check
      _
    $region38: #{gdfn_forward.1} parent=5 // pred_check_branch
      %235 = sbr.rel (%p232) target = $region40
    $region39: #{gdfn_forward.1} parent=5 // pred_region
      %s236 = ssub.s32 %s11, 1
      %p237 = scmp.lt.s32.totalorder %s20, 1
      %s238 = scalar_select %p237, %s20, 1
      %s239 = smul.addr %s238, 4
      %s240 = smul.addr %s239, 4
      %s241 = scalar_lea.vmem %s0, %s240
      %p242 = pneg %p49
      %p243 = pneg %p46
      %s244 = smul.u32 4, %s21
      %p245 = scmp.lt.s32.totalorder %s244, 7
      %s246 = scalar_select %p245, %s244, 7
      %s247 = smul.addr %s246, 4
      %s248 = scalar_lea.vmem %s1, %s247
      %p249 = pneg %p75
      %p250 = pneg %p72
      %s251 = smul.u32 4, %s21
      %p252 = scmp.lt.s32.totalorder %s251, 7
      %s253 = scalar_select %p252, %s251, 7
      %s254 = smul.addr %s253, 8
      %s255 = scalar_lea.vmem %s2, %s254
      %p256 = pneg %p101
      %p257 = pneg %p98
      %p258 = scmp.lt.s32.totalorder %s21, 1
      %s259 = scalar_select %p258, %s21, 1
      %s260 = smul.addr %s259, 2
      %s261 = smul.addr %s260, 4
      %s262 = scalar_lea.vmem %s3, %s261
      %p263 = pneg %p127
      %p264 = pneg %p124
      %p265 = pneg %p148
      %p266 = pneg %p145
      %p267 = pneg %p174
      %p268 = pneg %p171
      %p269 = scmp.lt.s32.totalorder %s20, 1
      %s270 = scalar_select %p269, %s20, 1
      %s271 = smul.addr %s270, 4
      %s272 = smul.addr %s271, 8
      %s273 = scalar_lea.vmem %s5, %s272
      %p274 = scmp.lt.s32.totalorder %s20, 1
      %s275 = scalar_select %p274, %s20, 1
      %s276 = smul.addr %s275, 4
      %s277 = smul.addr %s276, 4
      %s278 = scalar_lea.vmem %s0, %s277
      %s279 = smul.u32 4, %s21
      %p280 = scmp.lt.s32.totalorder %s279, 7
      %s281 = scalar_select %p280, %s279, 7
      %s282 = smul.addr %s281, 4
      %s283 = scalar_lea.vmem %s1, %s282
      %s284 = smul.u32 4, %s21
      %s285 = smul.u32 4, %s21
      %p286 = scmp.lt.s32.totalorder %s285, 7
      %s287 = scalar_select %p286, %s285, 7
      %s288 = smul.addr %s287, 8
      %s289 = scalar_lea.vmem %s2, %s288
      %s290 = smul.u32 4, %s21
      %p291 = scmp.lt.s32.totalorder %s21, 1
      %s292 = scalar_select %p291, %s21, 1
      %s293 = smul.addr %s292, 2
      %s294 = smul.addr %s293, 4
      %s295 = scalar_lea.vmem %s3, %s294
      %p296 = scmp.lt.s32.totalorder %s20, 1
      %s297 = scalar_select %p296, %s20, 1
      %s298 = smul.addr %s297, 4
      %s299 = smul.addr %s298, 8
      %s300 = scalar_lea.vmem %s5, %s299
      %v302 = vld [vmem:[%s278] sm:$0xff]
      %v303 = vld [vmem:[%s278 + $0x8] sm:$0xff]
      %v304 = vld [vmem:[%s283] sm:$0xf]
      %v305 = vld [vmem:[%s283 + $0x4] sm:$0xf]
      %v306 = vld [vmem:[%s283 + $0x8] sm:$0xf]
      %v307 = vld [vmem:[%s283 + $0xc] sm:$0xf]
      %v312 = vunpack.c.l.b16 %v304
      %v313 = vunpack.c.l.b16 %v305
      %v314 = vunpack.c.l.b16 %v306
      %v315 = vunpack.c.l.b16 %v307
      %v316 = vpack.c.b16 %v313, %v312
      %v317 = vpack.c.b16 %v315, %v314
      %v320 = vunpack.c.l.b16 %v302
      %v321 = vunpack.c.h.b16 %v302
      %v322 = vunpack.c.l.b16 %v303
      %v323 = vunpack.c.h.b16 %v303
      %v324 = vpack.c.b16 %v322, %v320
      %v325 = vpack.c.b16 %v323, %v321
      %vm328 = vcmask 130048
      %v330 = vsel %vm328, %v316, 0
      %v333 = vsel %vm328, %v317, 0
      %335 = vmatprep.subr.bf16.mxu0 %v325
      %336 = vmatpush1.bf16.msra.mxu0 %v324
      %337 = vmatprep.subr.bf16.mxu0 0
      %338 = vmatpush1.bf16.msra.mxu0 0
      %339 = vmatprep.subr.bf16.mxu0 0
      %340 = vmatpush1.bf16.msra.mxu0 0
      %341 = vmatprep.subr.bf16.mxu0 0
      %342 = vmatpush1.bf16.msra.mxu0 0
      %343 = vmatprep.subr.bf16.mxu0 0
      %344 = vmatpush1.bf16.msra.mxu0 0
      %345 = vmatprep.subr.bf16.mxu0 0
      %346 = vmatpush1.bf16.msra.mxu0 0
      %347 = vmatprep.subr.bf16.mxu0 0
      %348 = vmatpush1.bf16.msra.mxu0 0
      %349 = vmatprep.subr.bf16.mxu0 0
      %350 = vmatpush1.bf16.msra.mxu0 0
      %351 = vmatprep.subr.bf16.mxu0 0
      %352 = vmatpush1.bf16.msra.mxu0 0
      %353 = vmatprep.subr.bf16.mxu0 0
      %354 = vmatpush1.bf16.msra.mxu0 0
      %355 = vmatprep.subr.bf16.mxu0 0
      %356 = vmatpush1.bf16.msra.mxu0 0
      %357 = vmatprep.subr.bf16.mxu0 0
      %358 = vmatpush1.bf16.msra.mxu0 0
      %359 = vmatprep.subr.bf16.mxu0 0
      %360 = vmatpush1.bf16.msra.mxu0 0
      %361 = vmatprep.subr.bf16.mxu0 0
      %362 = vmatpush1.bf16.msra.mxu0 0
      %363 = vmatprep.subr.bf16.mxu0 0
      %364 = vmatpush1.bf16.msra.mxu0 0
      %365 = vmatprep.subr.bf16.mxu0 0
      %366 = vmatpush1.bf16.msra.mxu0 0
      %367 = vmatprep.mubr.bf16.mxu0 0
      %368 = vmatmul.mubr.bf16.gmra.mrb[0].mxu0 %v330
      %v369 = vpop.f32.mrb[0].mxu0
      %v370 = vadd.f32 0.0, %v369
      %v371 = vpop.f32.mrb[0].mxu0
      %v372 = vadd.f32 0.0, %v371
      %v373 = vpop.f32.mrb[0].mxu0
      %v374 = vadd.f32 0.0, %v373
      %v375 = vpop.f32.mrb[0].mxu0
      %v376 = vadd.f32 0.0, %v375
      %377 = vmatprep.mubr.bf16.mxu0 0
      %378 = vmatmul.mubr.bf16.gmra.mrb[0].mxu0 %v333
      %v379 = vpop.f32.mrb[0].mxu0
      %v380 = vadd.f32 0.0, %v379
      %v381 = vpop.f32.mrb[0].mxu0
      %v382 = vadd.f32 0.0, %v381
      %v383 = vpop.f32.mrb[0].mxu0
      %v384 = vadd.f32 0.0, %v383
      %v385 = vpop.f32.mrb[0].mxu0
      %v386 = vadd.f32 0.0, %v385
      %387 = vdwg.mxu0
      %v388 = vld [vmem:[%s289] sm:$0xff]
      %v389 = vld [vmem:[%s289 + $0x8] sm:$0xff]
      %v390 = vld [vmem:[%s289 + $0x10] sm:$0xff]
      %v391 = vld [vmem:[%s289 + $0x18] sm:$0xff]
      %v392 = vld [vmem:[%s4] sm:$0xff]
      %393 = vrot.lane.b32.xlu0 %v370, 16
      %v394 = vpop.permute.xlu0 %393
      %395 = vrot.lane.b32.xlu0 %v374, 16
      %v396 = vpop.permute.xlu0 %395
      %397 = vrot.lane.b32.xlu0 %v380, 16
      %v398 = vpop.permute.xlu0 %397
      %399 = vrot.lane.b32.xlu0 %v384, 16
      %v400 = vpop.permute.xlu0 %399
      %401 = vrot.lane.b32.xlu0 %v372, 16
      %v402 = vpop.permute.xlu0 %401
      %403 = vrot.lane.b32.xlu0 %v376, 16
      %v404 = vpop.permute.xlu0 %403
      %405 = vrot.lane.b32.xlu0 %v382, 16
      %v406 = vpop.permute.xlu0 %405
      %407 = vrot.lane.b32.xlu0 %v386, 16
      %v408 = vpop.permute.xlu0 %407
      %v409 = vlaneseq
      %v410 = vand.u32 %v409, 127
      %vm411 = vcmp.lt.s32.totalorder %v410, 16
      %v412 = vsel %vm411, %v394, %v402
      %v413 = vsel %vm411, %v396, %v404
      %v414 = vsel %vm411, %v398, %v406
      %v415 = vsel %vm411, %v400, %v408
      %v416 = vsel %vm411, %v402, %v394
      %v417 = vsel %vm411, %v404, %v396
      %v418 = vsel %vm411, %v406, %v398
      %v419 = vsel %vm411, %v408, %v400
      %v421 = vlaneseq
      %v422 = vshrl.u32 %v421, 7
      %v423 = vsub.s32 0, %v422
      %v424 = vrot.slane %v392, %v423
      %v425 = vlaneseq
      %v426 = vshrl.u32 %v425, 7
      %v427 = vsub.s32 4, %v426
      %v428 = vrot.slane %v392, %v427
      %v431 = vlaneseq
      %v432 = vshrl.u32 %v431, 7
      %v433 = vsub.s32 0, %v432
      %v434 = vrot.slane %v424, %v433
      %v435 = vlaneseq
      %v436 = vshrl.u32 %v435, 7
      %v437 = vsub.s32 0, %v436
      %v438 = vrot.slane %v428, %v437
      %v439 = vmul.f32 %v416, %v434
      %v440 = vmul.f32 %v412, %v438
      %v441 = vmul.f32 %v417, %v434
      %v442 = vmul.f32 %v413, %v438
      %v443 = vmul.f32 %v418, %v434
      %v444 = vmul.f32 %v414, %v438
      %v445 = vmul.f32 %v419, %v434
      %v446 = vmul.f32 %v415, %v438
      %447 = vrot.lane.b32.xlu0 %v370, 112
      %v448 = vpop.permute.xlu0 %447
      %449 = vrot.lane.b32.xlu0 %v374, 112
      %v450 = vpop.permute.xlu0 %449
      %451 = vrot.lane.b32.xlu0 %v380, 112
      %v452 = vpop.permute.xlu0 %451
      %453 = vrot.lane.b32.xlu0 %v384, 112
      %v454 = vpop.permute.xlu0 %453
      %455 = vrot.lane.b32.xlu0 %v372, 112
      %v456 = vpop.permute.xlu0 %455
      %457 = vrot.lane.b32.xlu0 %v376, 112
      %v458 = vpop.permute.xlu0 %457
      %459 = vrot.lane.b32.xlu0 %v382, 112
      %v460 = vpop.permute.xlu0 %459
      %461 = vrot.lane.b32.xlu0 %v386, 112
      %v462 = vpop.permute.xlu0 %461
      %vm463 = vcmp.lt.s32.totalorder %v410, 112
      %v464 = vsel %vm463, %v448, %v456
      %v465 = vsel %vm463, %v450, %v458
      %v466 = vsel %vm463, %v452, %v460
      %v467 = vsel %vm463, %v454, %v462
      %v468 = vsel %vm463, %v456, %v448
      %v469 = vsel %vm463, %v458, %v450
      %v470 = vsel %vm463, %v460, %v452
      %v471 = vsel %vm463, %v462, %v454
      %v472 = vlaneseq
      %v473 = vshrl.u32 %v472, 7
      %v474 = vsub.s32 1, %v473
      %v475 = vrot.slane %v392, %v474
      %v476 = vlaneseq
      %v477 = vshrl.u32 %v476, 7
      %v478 = vsub.s32 5, %v477
      %v479 = vrot.slane %v392, %v478
      %v482 = vlaneseq
      %v483 = vshrl.u32 %v482, 7
      %v484 = vsub.s32 1, %v483
      %v485 = vrot.slane %v475, %v484
      %v486 = vlaneseq
      %v487 = vshrl.u32 %v486, 7
      %v488 = vsub.s32 1, %v487
      %v489 = vrot.slane %v479, %v488
      %v490 = vmul.f32 %v464, %v485
      %v491 = vmul.f32 %v468, %v489
      %v492 = vmul.f32 %v465, %v485
      %v493 = vmul.f32 %v469, %v489
      %v494 = vmul.f32 %v466, %v485
      %v495 = vmul.f32 %v470, %v489
      %v496 = vmul.f32 %v467, %v485
      %v497 = vmul.f32 %v471, %v489
      %499 = vset.pattern.permute.xlu0 4
      %500 = vperm.xlu0 %499, %v388
      %v501 = vpop.permute.xlu0 %500
      %504 = vset.pattern.permute.xlu0 4
      %505 = vperm.xlu0 %504, %v389
      %v506 = vpop.permute.xlu0 %505
      %509 = vset.pattern.permute.xlu0 4
      %510 = vperm.xlu0 %509, %v390
      %v511 = vpop.permute.xlu0 %510
      %514 = vset.pattern.permute.xlu0 4
      %515 = vperm.xlu0 %514, %v391
      %v516 = vpop.permute.xlu0 %515
      %v518 = vmul.f32 %v370, %v501
      %v519 = vmul.f32 %v372, %v501
      %v520 = vmul.f32 %v374, %v506
      %v521 = vmul.f32 %v376, %v506
      %v522 = vmul.f32 %v380, %v511
      %v523 = vmul.f32 %v382, %v511
      %v524 = vmul.f32 %v384, %v516
      %v525 = vmul.f32 %v386, %v516
      %526 = vset.pattern.permute.xlu0 1
      %527 = vperm.xlu0 %526, %v388
      %v528 = vpop.permute.xlu0 %527
      %530 = vset.pattern.permute.xlu0 1
      %531 = vperm.xlu0 %530, %v389
      %v532 = vpop.permute.xlu0 %531
      %534 = vset.pattern.permute.xlu0 1
      %535 = vperm.xlu0 %534, %v390
      %v536 = vpop.permute.xlu0 %535
      %538 = vset.pattern.permute.xlu0 1
      %539 = vperm.xlu0 %538, %v391
      %v540 = vpop.permute.xlu0 %539
      %v542 = vmul.f32 %v439, %v528
      %v543 = vmul.f32 %v440, %v528
      %v544 = vmul.f32 %v441, %v532
      %v545 = vmul.f32 %v442, %v532
      %v546 = vmul.f32 %v443, %v536
      %v547 = vmul.f32 %v444, %v536
      %v548 = vmul.f32 %v445, %v540
      %v549 = vmul.f32 %v446, %v540
      %v550 = vadd.f32 %v518, %v542
      %v551 = vadd.f32 %v519, %v543
      %v552 = vadd.f32 %v520, %v544
      %v553 = vadd.f32 %v521, %v545
      %v554 = vadd.f32 %v522, %v546
      %v555 = vadd.f32 %v523, %v547
      %v556 = vadd.f32 %v524, %v548
      %v557 = vadd.f32 %v525, %v549
      %558 = vset.pattern.permute.xlu0 7
      %559 = vperm.xlu0 %558, %v388
      %v560 = vpop.permute.xlu0 %559
      %562 = vset.pattern.permute.xlu0 7
      %563 = vperm.xlu0 %562, %v389
      %v564 = vpop.permute.xlu0 %563
      %566 = vset.pattern.permute.xlu0 7
      %567 = vperm.xlu0 %566, %v390
      %v568 = vpop.permute.xlu0 %567
      %570 = vset.pattern.permute.xlu0 7
      %571 = vperm.xlu0 %570, %v391
      %v572 = vpop.permute.xlu0 %571
      %v574 = vmul.f32 %v490, %v560
      %v575 = vmul.f32 %v491, %v560
      %v576 = vmul.f32 %v492, %v564
      %v577 = vmul.f32 %v493, %v564
      %v578 = vmul.f32 %v494, %v568
      %v579 = vmul.f32 %v495, %v568
      %v580 = vmul.f32 %v496, %v572
      %v581 = vmul.f32 %v497, %v572
      %v582 = vadd.f32 %v550, %v574
      %v583 = vadd.f32 %v551, %v575
      %v584 = vadd.f32 %v552, %v576
      %v585 = vadd.f32 %v553, %v577
      %v586 = vadd.f32 %v554, %v578
      %v587 = vadd.f32 %v555, %v579
      %v588 = vadd.f32 %v556, %v580
      %v589 = vadd.f32 %v557, %v581
      %590 = vrot.lane.b32.xlu0 %v370, 1
      %v591 = vpop.permute.xlu0 %590
      %592 = vrot.lane.b32.xlu0 %v374, 1
      %v593 = vpop.permute.xlu0 %592
      %594 = vrot.lane.b32.xlu0 %v380, 1
      %v595 = vpop.permute.xlu0 %594
      %596 = vrot.lane.b32.xlu0 %v384, 1
      %v597 = vpop.permute.xlu0 %596
      %598 = vrot.lane.b32.xlu0 %v372, 1
      %v599 = vpop.permute.xlu0 %598
      %600 = vrot.lane.b32.xlu0 %v376, 1
      %v601 = vpop.permute.xlu0 %600
      %602 = vrot.lane.b32.xlu0 %v382, 1
      %v603 = vpop.permute.xlu0 %602
      %604 = vrot.lane.b32.xlu0 %v386, 1
      %v605 = vpop.permute.xlu0 %604
      %vm606 = vcmp.lt.s32.totalorder %v410, 1
      %v607 = vsel %vm606, %v591, %v599
      %v608 = vsel %vm606, %v593, %v601
      %v609 = vsel %vm606, %v595, %v603
      %v610 = vsel %vm606, %v597, %v605
      %v611 = vsel %vm606, %v599, %v591
      %v612 = vsel %vm606, %v601, %v593
      %v613 = vsel %vm606, %v603, %v595
      %v614 = vsel %vm606, %v605, %v597
      %615 = vset.pattern.permute.xlu0 3
      %616 = vperm.xlu0 %615, %v388
      %v617 = vpop.permute.xlu0 %616
      %619 = vset.pattern.permute.xlu0 3
      %620 = vperm.xlu0 %619, %v389
      %v621 = vpop.permute.xlu0 %620
      %623 = vset.pattern.permute.xlu0 3
      %624 = vperm.xlu0 %623, %v390
      %v625 = vpop.permute.xlu0 %624
      %627 = vset.pattern.permute.xlu0 3
      %628 = vperm.xlu0 %627, %v391
      %v629 = vpop.permute.xlu0 %628
      %v631 = vmul.f32 %v611, %v617
      %v632 = vmul.f32 %v607, %v617
      %v633 = vmul.f32 %v612, %v621
      %v634 = vmul.f32 %v608, %v621
      %v635 = vmul.f32 %v613, %v625
      %v636 = vmul.f32 %v609, %v625
      %v637 = vmul.f32 %v614, %v629
      %v638 = vmul.f32 %v610, %v629
      %639 = vrot.lane.b32.xlu0 %v439, 1
      %v640 = vpop.permute.xlu0 %639
      %641 = vrot.lane.b32.xlu0 %v441, 1
      %v642 = vpop.permute.xlu0 %641
      %643 = vrot.lane.b32.xlu0 %v443, 1
      %v644 = vpop.permute.xlu0 %643
      %645 = vrot.lane.b32.xlu0 %v445, 1
      %v646 = vpop.permute.xlu0 %645
      %647 = vrot.lane.b32.xlu0 %v440, 1
      %v648 = vpop.permute.xlu0 %647
      %649 = vrot.lane.b32.xlu0 %v442, 1
      %v650 = vpop.permute.xlu0 %649
      %651 = vrot.lane.b32.xlu0 %v444, 1
      %v652 = vpop.permute.xlu0 %651
      %653 = vrot.lane.b32.xlu0 %v446, 1
      %v654 = vpop.permute.xlu0 %653
      %v655 = vsel %vm606, %v640, %v648
      %v656 = vsel %vm606, %v642, %v650
      %v657 = vsel %vm606, %v644, %v652
      %v658 = vsel %vm606, %v646, %v654
      %v659 = vsel %vm606, %v648, %v640
      %v660 = vsel %vm606, %v650, %v642
      %v661 = vsel %vm606, %v652, %v644
      %v662 = vsel %vm606, %v654, %v646
      %663 = vset.pattern.permute.xlu0 0
      %664 = vperm.xlu0 %663, %v388
      %v665 = vpop.permute.xlu0 %664
      %667 = vset.pattern.permute.xlu0 0
      %668 = vperm.xlu0 %667, %v389
      %v669 = vpop.permute.xlu0 %668
      %671 = vset.pattern.permute.xlu0 0
      %672 = vperm.xlu0 %671, %v390
      %v673 = vpop.permute.xlu0 %672
      %675 = vset.pattern.permute.xlu0 0
      %676 = vperm.xlu0 %675, %v391
      %v677 = vpop.permute.xlu0 %676
      %v679 = vmul.f32 %v659, %v665
      %v680 = vmul.f32 %v655, %v665
      %v681 = vmul.f32 %v660, %v669
      %v682 = vmul.f32 %v656, %v669
      %v683 = vmul.f32 %v661, %v673
      %v684 = vmul.f32 %v657, %v673
      %v685 = vmul.f32 %v662, %v677
      %v686 = vmul.f32 %v658, %v677
      %v687 = vadd.f32 %v631, %v679
      %v688 = vadd.f32 %v632, %v680
      %v689 = vadd.f32 %v633, %v681
      %v690 = vadd.f32 %v634, %v682
      %v691 = vadd.f32 %v635, %v683
      %v692 = vadd.f32 %v636, %v684
      %v693 = vadd.f32 %v637, %v685
      %v694 = vadd.f32 %v638, %v686
      %695 = vrot.lane.b32.xlu0 %v490, 1
      %v696 = vpop.permute.xlu0 %695
      %697 = vrot.lane.b32.xlu0 %v492, 1
      %v698 = vpop.permute.xlu0 %697
      %699 = vrot.lane.b32.xlu0 %v494, 1
      %v700 = vpop.permute.xlu0 %699
      %701 = vrot.lane.b32.xlu0 %v496, 1
      %v702 = vpop.permute.xlu0 %701
      %703 = vrot.lane.b32.xlu0 %v491, 1
      %v704 = vpop.permute.xlu0 %703
      %705 = vrot.lane.b32.xlu0 %v493, 1
      %v706 = vpop.permute.xlu0 %705
      %707 = vrot.lane.b32.xlu0 %v495, 1
      %v708 = vpop.permute.xlu0 %707
      %709 = vrot.lane.b32.xlu0 %v497, 1
      %v710 = vpop.permute.xlu0 %709
      %v711 = vsel %vm606, %v696, %v704
      %v712 = vsel %vm606, %v698, %v706
      %v713 = vsel %vm606, %v700, %v708
      %v714 = vsel %vm606, %v702, %v710
      %v715 = vsel %vm606, %v704, %v696
      %v716 = vsel %vm606, %v706, %v698
      %v717 = vsel %vm606, %v708, %v700
      %v718 = vsel %vm606, %v710, %v702
      %719 = vset.pattern.permute.xlu0 6
      %720 = vperm.xlu0 %719, %v388
      %v721 = vpop.permute.xlu0 %720
      %723 = vset.pattern.permute.xlu0 6
      %724 = vperm.xlu0 %723, %v389
      %v725 = vpop.permute.xlu0 %724
      %727 = vset.pattern.permute.xlu0 6
      %728 = vperm.xlu0 %727, %v390
      %v729 = vpop.permute.xlu0 %728
      %731 = vset.pattern.permute.xlu0 6
      %732 = vperm.xlu0 %731, %v391
      %v733 = vpop.permute.xlu0 %732
      %v735 = vmul.f32 %v715, %v721
      %v736 = vmul.f32 %v711, %v721
      %v737 = vmul.f32 %v716, %v725
      %v738 = vmul.f32 %v712, %v725
      %v739 = vmul.f32 %v717, %v729
      %v740 = vmul.f32 %v713, %v729
      %v741 = vmul.f32 %v718, %v733
      %v742 = vmul.f32 %v714, %v733
      %v743 = vadd.f32 %v687, %v735
      %v744 = vadd.f32 %v688, %v736
      %v745 = vadd.f32 %v689, %v737
      %v746 = vadd.f32 %v690, %v738
      %v747 = vadd.f32 %v691, %v739
      %v748 = vadd.f32 %v692, %v740
      %v749 = vadd.f32 %v693, %v741
      %v750 = vadd.f32 %v694, %v742
      %v751 = vlaneseq
      %v752 = vshrl.u32 %v751, 7
      %v753 = vsub.s32 2, %v752
      %v754 = vrot.slane %v392, %v753
      %v755 = vlaneseq
      %v756 = vshrl.u32 %v755, 7
      %v757 = vsub.s32 6, %v756
      %v758 = vrot.slane %v392, %v757
      %v761 = vlaneseq
      %v762 = vshrl.u32 %v761, 7
      %v763 = vsub.s32 2, %v762
      %v764 = vrot.slane %v754, %v763
      %v765 = vlaneseq
      %v766 = vshrl.u32 %v765, 7
      %v767 = vsub.s32 2, %v766
      %v768 = vrot.slane %v758, %v767
      %v769 = vmul.f32 %v743, %v764
      %v770 = vmul.f32 %v744, %v768
      %v771 = vmul.f32 %v745, %v764
      %v772 = vmul.f32 %v746, %v768
      %v773 = vmul.f32 %v747, %v764
      %v774 = vmul.f32 %v748, %v768
      %v775 = vmul.f32 %v749, %v764
      %v776 = vmul.f32 %v750, %v768
      %777 = vrot.lane.b32.xlu0 %v370, 127
      %v778 = vpop.permute.xlu0 %777
      %779 = vrot.lane.b32.xlu0 %v374, 127
      %v780 = vpop.permute.xlu0 %779
      %781 = vrot.lane.b32.xlu0 %v380, 127
      %v782 = vpop.permute.xlu0 %781
      %783 = vrot.lane.b32.xlu0 %v384, 127
      %v784 = vpop.permute.xlu0 %783
      %785 = vrot.lane.b32.xlu0 %v372, 127
      %v786 = vpop.permute.xlu0 %785
      %787 = vrot.lane.b32.xlu0 %v376, 127
      %v788 = vpop.permute.xlu0 %787
      %789 = vrot.lane.b32.xlu0 %v382, 127
      %v790 = vpop.permute.xlu0 %789
      %791 = vrot.lane.b32.xlu0 %v386, 127
      %v792 = vpop.permute.xlu0 %791
      %vm793 = vcmp.lt.s32.totalorder %v410, 127
      %v794 = vsel %vm793, %v778, %v786
      %v795 = vsel %vm793, %v780, %v788
      %v796 = vsel %vm793, %v782, %v790
      %v797 = vsel %vm793, %v784, %v792
      %v798 = vsel %vm793, %v786, %v778
      %v799 = vsel %vm793, %v788, %v780
      %v800 = vsel %vm793, %v790, %v782
      %v801 = vsel %vm793, %v792, %v784
      %802 = vset.pattern.permute.xlu0 5
      %803 = vperm.xlu0 %802, %v388
      %v804 = vpop.permute.xlu0 %803
      %806 = vset.pattern.permute.xlu0 5
      %807 = vperm.xlu0 %806, %v389
      %v808 = vpop.permute.xlu0 %807
      %810 = vset.pattern.permute.xlu0 5
      %811 = vperm.xlu0 %810, %v390
      %v812 = vpop.permute.xlu0 %811
      %814 = vset.pattern.permute.xlu0 5
      %815 = vperm.xlu0 %814, %v391
      %v816 = vpop.permute.xlu0 %815
      %v818 = vmul.f32 %v794, %v804
      %v819 = vmul.f32 %v798, %v804
      %v820 = vmul.f32 %v795, %v808
      %v821 = vmul.f32 %v799, %v808
      %v822 = vmul.f32 %v796, %v812
      %v823 = vmul.f32 %v800, %v812
      %v824 = vmul.f32 %v797, %v816
      %v825 = vmul.f32 %v801, %v816
      %826 = vrot.lane.b32.xlu0 %v439, 127
      %v827 = vpop.permute.xlu0 %826
      %828 = vrot.lane.b32.xlu0 %v441, 127
      %v829 = vpop.permute.xlu0 %828
      %830 = vrot.lane.b32.xlu0 %v443, 127
      %v831 = vpop.permute.xlu0 %830
      %832 = vrot.lane.b32.xlu0 %v445, 127
      %v833 = vpop.permute.xlu0 %832
      %834 = vrot.lane.b32.xlu0 %v440, 127
      %v835 = vpop.permute.xlu0 %834
      %836 = vrot.lane.b32.xlu0 %v442, 127
      %v837 = vpop.permute.xlu0 %836
      %838 = vrot.lane.b32.xlu0 %v444, 127
      %v839 = vpop.permute.xlu0 %838
      %840 = vrot.lane.b32.xlu0 %v446, 127
      %v841 = vpop.permute.xlu0 %840
      %v842 = vsel %vm793, %v827, %v835
      %v843 = vsel %vm793, %v829, %v837
      %v844 = vsel %vm793, %v831, %v839
      %v845 = vsel %vm793, %v833, %v841
      %v846 = vsel %vm793, %v835, %v827
      %v847 = vsel %vm793, %v837, %v829
      %v848 = vsel %vm793, %v839, %v831
      %v849 = vsel %vm793, %v841, %v833
      %850 = vset.pattern.permute.xlu0 2
      %851 = vperm.xlu0 %850, %v388
      %v852 = vpop.permute.xlu0 %851
      %854 = vset.pattern.permute.xlu0 2
      %855 = vperm.xlu0 %854, %v389
      %v856 = vpop.permute.xlu0 %855
      %858 = vset.pattern.permute.xlu0 2
      %859 = vperm.xlu0 %858, %v390
      %v860 = vpop.permute.xlu0 %859
      %862 = vset.pattern.permute.xlu0 2
      %863 = vperm.xlu0 %862, %v391
      %v864 = vpop.permute.xlu0 %863
      %v866 = vmul.f32 %v842, %v852
      %v867 = vmul.f32 %v846, %v852
      %v868 = vmul.f32 %v843, %v856
      %v869 = vmul.f32 %v847, %v856
      %v870 = vmul.f32 %v844, %v860
      %v871 = vmul.f32 %v848, %v860
      %v872 = vmul.f32 %v845, %v864
      %v873 = vmul.f32 %v849, %v864
      %v874 = vadd.f32 %v818, %v866
      %v875 = vadd.f32 %v819, %v867
      %v876 = vadd.f32 %v820, %v868
      %v877 = vadd.f32 %v821, %v869
      %v878 = vadd.f32 %v822, %v870
      %v879 = vadd.f32 %v823, %v871
      %v880 = vadd.f32 %v824, %v872
      %v881 = vadd.f32 %v825, %v873
      %882 = vrot.lane.b32.xlu0 %v490, 127
      %v883 = vpop.permute.xlu0 %882
      %884 = vrot.lane.b32.xlu0 %v492, 127
      %v885 = vpop.permute.xlu0 %884
      %886 = vrot.lane.b32.xlu0 %v494, 127
      %v887 = vpop.permute.xlu0 %886
      %888 = vrot.lane.b32.xlu0 %v496, 127
      %v889 = vpop.permute.xlu0 %888
      %890 = vrot.lane.b32.xlu0 %v491, 127
      %v891 = vpop.permute.xlu0 %890
      %892 = vrot.lane.b32.xlu0 %v493, 127
      %v893 = vpop.permute.xlu0 %892
      %894 = vrot.lane.b32.xlu0 %v495, 127
      %v895 = vpop.permute.xlu0 %894
      %896 = vrot.lane.b32.xlu0 %v497, 127
      %v897 = vpop.permute.xlu0 %896
      %v898 = vsel %vm793, %v883, %v891
      %v899 = vsel %vm793, %v885, %v893
      %v900 = vsel %vm793, %v887, %v895
      %v901 = vsel %vm793, %v889, %v897
      %v902 = vsel %vm793, %v891, %v883
      %v903 = vsel %vm793, %v893, %v885
      %v904 = vsel %vm793, %v895, %v887
      %v905 = vsel %vm793, %v897, %v889
      %906 = vset.pattern.permute.xlu0 8
      %907 = vperm.xlu0 %906, %v388
      %v908 = vpop.permute.xlu0 %907
      %910 = vset.pattern.permute.xlu0 8
      %911 = vperm.xlu0 %910, %v389
      %v912 = vpop.permute.xlu0 %911
      %914 = vset.pattern.permute.xlu0 8
      %915 = vperm.xlu0 %914, %v390
      %v916 = vpop.permute.xlu0 %915
      %918 = vset.pattern.permute.xlu0 8
      %919 = vperm.xlu0 %918, %v391
      %v920 = vpop.permute.xlu0 %919
      %v922 = vmul.f32 %v898, %v908
      %v923 = vmul.f32 %v902, %v908
      %v924 = vmul.f32 %v899, %v912
      %v925 = vmul.f32 %v903, %v912
      %v926 = vmul.f32 %v900, %v916
      %v927 = vmul.f32 %v904, %v916
      %v928 = vmul.f32 %v901, %v920
      %v929 = vmul.f32 %v905, %v920
      %v930 = vadd.f32 %v874, %v922
      %v931 = vadd.f32 %v875, %v923
      %v932 = vadd.f32 %v876, %v924
      %v933 = vadd.f32 %v877, %v925
      %v934 = vadd.f32 %v878, %v926
      %v935 = vadd.f32 %v879, %v927
      %v936 = vadd.f32 %v880, %v928
      %v937 = vadd.f32 %v881, %v929
      %v938 = vlaneseq
      %v939 = vshrl.u32 %v938, 7
      %v940 = vsub.s32 3, %v939
      %v941 = vrot.slane %v392, %v940
      %v942 = vlaneseq
      %v943 = vshrl.u32 %v942, 7
      %v944 = vsub.s32 7, %v943
      %v945 = vrot.slane %v392, %v944
      %v948 = vlaneseq
      %v949 = vshrl.u32 %v948, 7
      %v950 = vsub.s32 3, %v949
      %v951 = vrot.slane %v941, %v950
      %v952 = vlaneseq
      %v953 = vshrl.u32 %v952, 7
      %v954 = vsub.s32 3, %v953
      %v955 = vrot.slane %v945, %v954
      %v956 = vmul.f32 %v930, %v951
      %v957 = vmul.f32 %v931, %v955
      %v958 = vmul.f32 %v932, %v951
      %v959 = vmul.f32 %v933, %v955
      %v960 = vmul.f32 %v934, %v951
      %v961 = vmul.f32 %v935, %v955
      %v962 = vmul.f32 %v936, %v951
      %v963 = vmul.f32 %v937, %v955
      %v964 = vadd.f32 %v582, %v769
      %v965 = vadd.f32 %v583, %v770
      %v966 = vadd.f32 %v584, %v771
      %v967 = vadd.f32 %v585, %v772
      %v968 = vadd.f32 %v586, %v773
      %v969 = vadd.f32 %v587, %v774
      %v970 = vadd.f32 %v588, %v775
      %v971 = vadd.f32 %v589, %v776
      %v972 = vadd.f32 %v964, %v956
      %v973 = vadd.f32 %v965, %v957
      %v974 = vadd.f32 %v966, %v958
      %v975 = vadd.f32 %v967, %v959
      %v976 = vadd.f32 %v968, %v960
      %v977 = vadd.f32 %v969, %v961
      %v978 = vadd.f32 %v970, %v962
      %v979 = vadd.f32 %v971, %v963
      %v980 = vmul.f32 %v972, 0.5
      %v981 = vmul.f32 %v973, 0.5
      %v982 = vmul.f32 %v974, 0.5
      %v983 = vmul.f32 %v975, 0.5
      %v984 = vmul.f32 %v972, 0.70710677
      %v985 = vmul.f32 %v973, 0.70710677
      %v986 = vmul.f32 %v974, 0.70710677
      %v987 = vmul.f32 %v975, 0.70710677
      %v988 = vand.u32 2147483647, %v984
      %v989 = vand.u32 2147483647, %v985
      %v990 = vand.u32 2147483647, %v986
      %v991 = vand.u32 2147483647, %v987
      %v992 = vmul.f32 %v988, 0.3275911
      %v993 = vmul.f32 %v989, 0.3275911
      %v994 = vmul.f32 %v990, 0.3275911
      %v995 = vmul.f32 %v991, 0.3275911
      %v996 = vadd.f32 %v992, 1.0
      %v997 = vadd.f32 %v993, 1.0
      %v998 = vadd.f32 %v994, 1.0
      %v999 = vadd.f32 %v995, 1.0
      %v1000 = vrcp.pop %v996
      %v1001 = vmul.f32 1.0, %v1000
      %v1002 = vrcp.pop %v997
      %v1003 = vmul.f32 1.0, %v1002
      %v1004 = vrcp.pop %v998
      %v1005 = vmul.f32 1.0, %v1004
      %v1006 = vrcp.pop %v999
      %v1007 = vmul.f32 1.0, %v1006
      %v1008 = vmul.f32 %v1001, 1.0614054
      %v1009 = vmul.f32 %v1003, 1.0614054
      %v1010 = vmul.f32 %v1005, 1.0614054
      %v1011 = vmul.f32 %v1007, 1.0614054
      %v1012 = vadd.f32 %v1008, -1.4531521
      %v1013 = vadd.f32 %v1009, -1.4531521
      %v1014 = vadd.f32 %v1010, -1.4531521
      %v1015 = vadd.f32 %v1011, -1.4531521
      %v1016 = vmul.f32 %v1001, %v1012
      %v1017 = vmul.f32 %v1003, %v1013
      %v1018 = vmul.f32 %v1005, %v1014
      %v1019 = vmul.f32 %v1007, %v1015
      %v1020 = vadd.f32 %v1016, 1.4214138
      %v1021 = vadd.f32 %v1017, 1.4214138
      %v1022 = vadd.f32 %v1018, 1.4214138
      %v1023 = vadd.f32 %v1019, 1.4214138
      %v1024 = vmul.f32 %v1001, %v1020
      %v1025 = vmul.f32 %v1003, %v1021
      %v1026 = vmul.f32 %v1005, %v1022
      %v1027 = vmul.f32 %v1007, %v1023
      %v1028 = vadd.f32 %v1024, -0.28449672
      %v1029 = vadd.f32 %v1025, -0.28449672
      %v1030 = vadd.f32 %v1026, -0.28449672
      %v1031 = vadd.f32 %v1027, -0.28449672
      %v1032 = vmul.f32 %v1001, %v1028
      %v1033 = vmul.f32 %v1003, %v1029
      %v1034 = vmul.f32 %v1005, %v1030
      %v1035 = vmul.f32 %v1007, %v1031
      %v1036 = vadd.f32 %v1032, 0.2548296
      %v1037 = vadd.f32 %v1033, 0.2548296
      %v1038 = vadd.f32 %v1034, 0.2548296
      %v1039 = vadd.f32 %v1035, 0.2548296
      %v1040 = vmul.f32 %v1001, %v1036
      %v1041 = vmul.f32 %v1003, %v1037
      %v1042 = vmul.f32 %v1005, %v1038
      %v1043 = vmul.f32 %v1007, %v1039
      %v1044 = vsub.f32 0.0, %v988
      %v1045 = vsub.f32 0.0, %v989
      %v1046 = vsub.f32 0.0, %v990
      %v1047 = vsub.f32 0.0, %v991
      %v1048 = vmul.f32 %v1044, %v988
      %v1049 = vmul.f32 %v1045, %v989
      %v1050 = vmul.f32 %v1046, %v990
      %v1051 = vmul.f32 %v1047, %v991
      %v1052 = vmul.f32 %v1048, 1.442695
      %v1053 = vpow.pop %v1052
      %v1054 = vmul.f32 %v1049, 1.442695
      %v1055 = vpow.pop %v1054
      %v1056 = vmul.f32 %v1050, 1.442695
      %v1057 = vpow.pop %v1056
      %v1058 = vmul.f32 %v1051, 1.442695
      %v1059 = vpow.pop %v1058
      %v1060 = vmul.f32 %v1040, %v1053
      %v1061 = vmul.f32 %v1041, %v1055
      %v1062 = vmul.f32 %v1042, %v1057
      %v1063 = vmul.f32 %v1043, %v1059
      %v1064 = vsub.f32 1.0, %v1060
      %v1065 = vsub.f32 1.0, %v1061
      %v1066 = vsub.f32 1.0, %v1062
      %v1067 = vsub.f32 1.0, %v1063
      %vm1068 = vcmp.ge.f32.partialorder %v984, 0.0
      %vm1069 = vcmp.ge.f32.partialorder %v985, 0.0
      %vm1070 = vcmp.ge.f32.partialorder %v986, 0.0
      %vm1071 = vcmp.ge.f32.partialorder %v987, 0.0
      %v1072 = vsub.f32 0.0, %v1064
      %v1073 = vsub.f32 0.0, %v1065
      %v1074 = vsub.f32 0.0, %v1066
      %v1075 = vsub.f32 0.0, %v1067
      %v1076 = vsel %vm1068, %v1064, %v1072
      %v1077 = vsel %vm1069, %v1065, %v1073
      %v1078 = vsel %vm1070, %v1066, %v1074
      %v1079 = vsel %vm1071, %v1067, %v1075
      %v1080 = vadd.f32 %v1076, 1.0
      %v1081 = vadd.f32 %v1077, 1.0
      %v1082 = vadd.f32 %v1078, 1.0
      %v1083 = vadd.f32 %v1079, 1.0
      %v1084 = vmul.f32 %v980, %v1080
      %v1085 = vmul.f32 %v981, %v1081
      %v1086 = vmul.f32 %v982, %v1082
      %v1087 = vmul.f32 %v983, %v1083
      %v1088 = vmul.f32 %v1084, %v976
      %v1089 = vmul.f32 %v1085, %v977
      %v1090 = vmul.f32 %v1086, %v978
      %v1091 = vmul.f32 %v1087, %v979
      %v1092 = vld [vmem:[%s295] sm:$0xf]
      %v1093 = vld [vmem:[%s295 + $0x4] sm:$0xf]
      %v1094 = vpack.c.bf16 %v1090, %v1088
      %v1095 = vpack.c.bf16 %v1091, %v1089
      %v1098 = vunpack.c.l.b16 %v1092
      %v1099 = vunpack.c.l.b16 %v1093
      %v1100 = vpack.c.b16 %v1099, %v1098
      %v1102 = vsel %vm328, %v1100, 0
      %1104 = vmatprep.subr.bf16.mxu0 %v1095
      %1105 = vmatpush1.bf16.msra.mxu0 %v1094
      %1106 = vmatprep.subr.bf16.mxu0 0
      %1107 = vmatpush1.bf16.msra.mxu0 0
      %1108 = vmatprep.subr.bf16.mxu0 0
      %1109 = vmatpush1.bf16.msra.mxu0 0
      %1110 = vmatprep.subr.bf16.mxu0 0
      %1111 = vmatpush1.bf16.msra.mxu0 0
      %1112 = vmatprep.subr.bf16.mxu0 0
      %1113 = vmatpush1.bf16.msra.mxu0 0
      %1114 = vmatprep.subr.bf16.mxu0 0
      %1115 = vmatpush1.bf16.msra.mxu0 0
      %1116 = vmatprep.subr.bf16.mxu0 0
      %1117 = vmatpush1.bf16.msra.mxu0 0
      %1118 = vmatprep.subr.bf16.mxu0 0
      %1119 = vmatpush1.bf16.msra.mxu0 0
      %1120 = vmatprep.subr.bf16.mxu0 0
      %1121 = vmatpush1.bf16.msra.mxu0 0
      %1122 = vmatprep.subr.bf16.mxu0 0
      %1123 = vmatpush1.bf16.msra.mxu0 0
      %1124 = vmatprep.subr.bf16.mxu0 0
      %1125 = vmatpush1.bf16.msra.mxu0 0
      %1126 = vmatprep.subr.bf16.mxu0 0
      %1127 = vmatpush1.bf16.msra.mxu0 0
      %1128 = vmatprep.subr.bf16.mxu0 0
      %1129 = vmatpush1.bf16.msra.mxu0 0
      %1130 = vmatprep.subr.bf16.mxu0 0
      %1131 = vmatpush1.bf16.msra.mxu0 0
      %1132 = vmatprep.subr.bf16.mxu0 0
      %1133 = vmatpush1.bf16.msra.mxu0 0
      %1134 = vmatprep.subr.bf16.mxu0 0
      %1135 = vmatpush1.bf16.msra.mxu0 0
      %1136 = vmatprep.mubr.bf16.mxu0 0
      %1137 = vmatmul.mubr.bf16.gmra.mrb[0].mxu0 %v1102
      %v1138 = vpop.f32.mrb[0].mxu0
      %v1139 = vadd.f32 0.0, %v1138
      %v1140 = vpop.f32.mrb[0].mxu0
      %v1141 = vadd.f32 0.0, %v1140
      %v1142 = vpop.f32.mrb[0].mxu0
      %v1143 = vadd.f32 0.0, %v1142
      %v1144 = vpop.f32.mrb[0].mxu0
      %v1145 = vadd.f32 0.0, %v1144
      %1146 = vdwg.mxu0
      %p1147 = scmp.eq.s32.totalorder %s21, 0
      // Predicated region
      $region41: #{gdfn_forward.1} parent=39 // pred_check
        %p1148 = pneg %p1147
      $region42: #{gdfn_forward.1} parent=39 // pred_check_branch
        %1150 = sbr.rel (%p1148) target = $region44
      $region43: #{gdfn_forward.1} parent=39 // pred_region
        %1151 = vst [vmem:[%s300] sm:$0xff] %v1139
        %1152 = vst [vmem:[%s300 + $0x8] sm:$0xff] %v1141
        %1153 = vst [vmem:[%s300 + $0x10] sm:$0xff] %v1143
        %1154 = vst [vmem:[%s300 + $0x18] sm:$0xff] %v1145
      $region44: #{gdfn_forward.1} parent=39 // pred_fallthru
        _
      %p1155 = scmp.gt.s32.totalorder %s21, 0
      // Predicated region
      $region45: #{gdfn_forward.1} parent=39 // pred_check
        %p1156 = pneg %p1155
      $region46: #{gdfn_forward.1} parent=39 // pred_check_branch
        %1158 = sbr.rel (%p1156) target = $region48
      $region47: #{gdfn_forward.1} parent=39 // pred_region
        %v1159 = vld [vmem:[%s300] sm:$0xff]
        %v1160 = vld [vmem:[%s300 + $0x8] sm:$0xff]
        %v1161 = vld [vmem:[%s300 + $0x10] sm:$0xff]
        %v1162 = vld [vmem:[%s300 + $0x18] sm:$0xff]
        %v1163 = vadd.f32 %v1159, %v1139
        %v1164 = vadd.f32 %v1160, %v1141
        %v1165 = vadd.f32 %v1161, %v1143
        %v1166 = vadd.f32 %v1162, %v1145
        %1167 = vst [vmem:[%s300] sm:$0xff] %v1163
        %1168 = vst [vmem:[%s300 + $0x8] sm:$0xff] %v1164
        %1169 = vst [vmem:[%s300 + $0x10] sm:$0xff] %v1165
        %1170 = vst [vmem:[%s300 + $0x18] sm:$0xff] %v1166
      $region48: #{gdfn_forward.1} parent=39 // pred_fallthru
        _
      %p1171 = scmp.lt.s32.totalorder %s20, 1
      %s1172 = scalar_select %p1171, %s20, 1
      %s1173 = smul.addr %s1172, 4
      %s1174 = smul.addr %s1173, 8
      %s1175 = scalar_lea.vmem %s5, %s1174
      // Predicated region
      $region49: #{gdfn_forward.1} parent=39 // pred_check
        %p1176 = pneg %p171
      $region50: #{gdfn_forward.1} parent=39 // pred_check_branch
        %1178 = sbr.rel (%p1176) target = $region52
      $region51: #{gdfn_forward.1} parent=39 // pred_region
        _
      $region52: #{gdfn_forward.1} parent=39 // pred_fallthru
        _
    $region40: #{gdfn_forward.1} parent=5 // pred_fallthru
      _
    %p1179 = scmp.le.s32.totalorder 2, %s11
    // Predicated region
    $region53: #{gdfn_forward.1} parent=5 // pred_check
      %p1180 = pneg %p1179
    $region54: #{gdfn_forward.1} parent=5 // pred_check_branch
      %1182 = sbr.rel (%p1180) target = $region56
    $region55: #{gdfn_forward.1} parent=5 // pred_region
      %s1183 = ssub.s32 %s11, 2
      // Predicated region
      $region57: #{gdfn_forward.1} parent=55 // pred_check
        %p1184 = pneg %p177
      $region58: #{gdfn_forward.1} parent=55 // pred_check_branch
        %1186 = sbr.rel (%p1184) target = $region60
      $region59: #{gdfn_forward.1} parent=55 // pred_region
        %p1187 = scmp.lt.s32.totalorder %s22, 1
        %s1188 = scalar_select %p1187, %s22, 1
        %s1189 = smul.addr %s1188, 4
        %s1190 = smul.addr %s1189, 8
        %s1191 = scalar_lea.vmem %s5, %s1190
      $region60: #{gdfn_forward.1} parent=55 // pred_fallthru
        _
    $region56: #{gdfn_forward.1} parent=5 // pred_fallthru
      _
  $region6: #{gdfn_forward.1} parent=0 // loop_footer
    %s15 = sadd.s32 1, %s11
  $region7: #{gdfn_forward.1} parent=0 // loop_footer_branch
    %10 = sbr.rel target = $region3
  $region8: #{gdfn_forward.1} parent=0 // loop_exit
    _

</llo_original>
